<compile_context>
chip_gen: v5e
topology: v5e:2x2
jax: 0.10.0
libtpu: 0.0.40
codegen_flags: <defaults>
</compile_context>

<pallas_src>
import jax
import jax.numpy as jnp
from jax.experimental import pallas as pl
from jax.experimental.pallas import tpu as pltpu


def _round_up(a, b):
    return ((a + b - 1) // b) * b


# ----------------------------- Pallas kernel ------------------------------- #
def _resnet_block_kernel(x_ref, w1_ref, b1_ref, a1_ref, w2_ref, b2_ref, a2_ref,
                         o_ref):
    # x_ref : (3, C, TM)  the 3 pooling-window slabs for TM pooled positions,
    #                     channels on sublanes, positions on lanes (lane-dense).
    # w*_ref: (C_out, C_in)  conv k=1 weights with BN scale folded in (VMEM, resident).
    # b*_ref: (C, 1)         effective bias = BN_scale * conv_bias + BN_shift.
    # a*_ref: (1,) in SMEM   PReLU slope.
    # o_ref : (C, TM)        max-pooled output tile.
    w1 = w1_ref[...]
    w2 = w2_ref[...]
    b1 = b1_ref[...]
    b2 = b2_ref[...]
    a1 = a1_ref[0]
    a2 = a2_ref[0]

    pooled = None
    # Static unroll over the 3 positions of the pooling window; each slab is an
    # independent per-position computation, so we can pool incrementally and never
    # keep more than one (C, TM) activation slab live.
    for k in range(3):
        xk = x_ref[k]                                               # (C, TM)
        # conv1 (k=1) + folded bn1  -> channel-mixing matmul on the MXU
        y = jnp.dot(w1, xk, preferred_element_type=jnp.float32) + b1
        # prelu1
        y = jnp.where(y > 0, y, a1 * y)
        # conv2 (k=1) + folded bn2
        y = jnp.dot(w2, y, preferred_element_type=jnp.float32) + b2
        # residual add
        y = y + xk
        # prelu2
        y = jnp.where(y > 0, y, a2 * y)
        # max_pool1d(kernel_size=3, stride=3): running max over the 3 slabs
        pooled = y if pooled is None else jnp.maximum(pooled, y)

    o_ref[...] = pooled.astype(o_ref.dtype)


# ------------------------------- Wrapper ------------------------------------ #
def resnet_block(x, params, *, eps=1e-5, tm_max=1024):
    """x: (N, C, L) float32, same axis convention as PyTorch Conv1d input."""
    N, C, L = x.shape
    P = L // 3                 # MaxPool1d(3) output length (remainder dropped, floor mode)
    M = N * P                  # total pooled positions

    # ---- fold eval-mode BatchNorm into the k=1 convolutions ----
    s1 = params["bn1_gamma"] * jax.lax.rsqrt(params["bn1_var"] + eps)
    w1_eff = params["conv1_w"] * s1[:, None]                              # (C_out, C_in)
    b1_eff = (s1 * params["conv1_b"] + params["bn1_beta"]
              - s1 * params["bn1_mean"])[:, None]                         # (C, 1)

    s2 = params["bn2_gamma"] * jax.lax.rsqrt(params["bn2_var"] + eps)
    w2_eff = params["conv2_w"] * s2[:, None]
    b2_eff = (s2 * params["conv2_b"] + params["bn2_beta"]
              - s2 * params["bn2_mean"])[:, None]

    # ---- layout glue: (N, C, L) -> (3, C, M)  (slab k, channel, pooled position) ----
    xs = x[:, :, :3 * P].reshape(N, C, P, 3)                   # xs[n, c, p, k]
    x3 = jnp.transpose(xs, (3, 1, 0, 2)).reshape(3, C, M)      # x3[k, c, n*P + p]

    # ---- tile the pooled-position (lane) axis ----
    TM = min(tm_max, _round_up(M, 128))        # lane-aligned, modest working set
    M_pad = _round_up(M, TM)
    if M_pad != M:
        x3 = jnp.pad(x3, ((0, 0), (0, 0), (0, M_pad - M)))
    grid = (M_pad // TM,)

    out2d = pl.pallas_call(
        _resnet_block_kernel,
        out_shape=jax.ShapeDtypeStruct((C, M_pad), x.dtype),
        grid=grid,
        in_specs=[
            # x slabs: new (3, C, TM) tile per grid step -> pipelined/double-buffered
            pl.BlockSpec((3, C, TM), lambda i: (0, 0, i)),
            # weights / biases: constant block index -> fetched once, stay resident
            pl.BlockSpec((C, C), lambda i: (0, 0)),
            pl.BlockSpec((C, 1), lambda i: (0, 0)),
            pl.BlockSpec(memory_space=pltpu.MemorySpace.SMEM),   # prelu1 alpha
            pl.BlockSpec((C, C), lambda i: (0, 0)),
            pl.BlockSpec((C, 1), lambda i: (0, 0)),
            pl.BlockSpec(memory_space=pltpu.MemorySpace.SMEM),   # prelu2 alpha
        ],
        out_specs=pl.BlockSpec((C, TM), lambda i: (0, i)),       # lane-dense store
        compiler_params=pltpu.CompilerParams(
            dimension_semantics=("parallel",)),                  # megacore split on v7x
    )(x3, w1_eff, b1_eff, params["prelu1_alpha"],
      w2_eff, b2_eff, params["prelu2_alpha"])

    # ---- layout glue back to PyTorch (N, C, L//3) ----
    out2d = out2d[:, :M]
    return jnp.transpose(out2d.reshape(C, N, P), (1, 0, 2))


# --------------------- Pure-JAX reference (same semantics) ------------------ #
def resnet_block_reference(x, p, *, eps=1e-5):
    def conv(z, w, b):
        return jnp.einsum("oi,nil->nol", w, z) + b[None, :, None]

    def bn(z, g, bta, mean, var):
        return g[None, :, None] * (z - mean[None, :, None]) \
            / jnp.sqrt(var[None, :, None] + eps) + bta[None, :, None]

    def prelu(z, a):
        return jnp.where(z > 0, z, a * z)

    y = prelu(bn(conv(x, p["conv1_w"], p["conv1_b"]),
                 p["bn1_gamma"], p["bn1_beta"], p["bn1_mean"], p["bn1_var"]),
              p["prelu1_alpha"][0])
    y = bn(conv(y, p["conv2_w"], p["conv2_b"]),
           p["bn2_gamma"], p["bn2_beta"], p["bn2_mean"], p["bn2_var"])
    y = y + x
    y = prelu(y, p["prelu2_alpha"][0])
    N, C, L = y.shape
    P = L // 3
    return y[:, :, :3 * P].reshape(N, C, P, 3).max(axis=-1)


# ------------------------------- Params -------------------------------------- #
def make_params(key, n_channels):
    ks = jax.random.split(key, 10)
    C = n_channels
    return {
        "conv1_w": jax.random.normal(ks[0], (C, C), jnp.float32) * 0.1,
        "conv1_b": jax.random.normal(ks[1], (C,), jnp.float32) * 0.1,
        "conv2_w": jax.random.normal(ks[2], (C, C), jnp.float32) * 0.1,
        "conv2_b": jax.random.normal(ks[3], (C,), jnp.float32) * 0.1,
        "bn1_gamma": 1.0 + 0.1 * jax.random.normal(ks[4], (C,), jnp.float32),
        "bn1_beta": 0.1 * jax.random.normal(ks[5], (C,), jnp.float32),
        "bn1_mean": 0.1 * jax.random.normal(ks[6], (C,), jnp.float32),
        "bn1_var": jnp.abs(1.0 + 0.1 * jax.random.normal(ks[7], (C,), jnp.float32)),
        "bn2_gamma": 1.0 + 0.1 * jax.random.normal(ks[8], (C,), jnp.float32),
        "bn2_beta": 0.1 * jax.random.normal(ks[9], (C,), jnp.float32),
        "bn2_mean": jnp.zeros((C,), jnp.float32),
        "bn2_var": jnp.ones((C,), jnp.float32),
        "prelu1_alpha": jnp.full((1,), 0.25, jnp.float32),   # nn.PReLU default
        "prelu2_alpha": jnp.full((1,), 0.25, jnp.float32),
    }


if __name__ == "__main__":
    N, C, L = 2, 32, 48            # batch, channels, sequence length (L % 3 == 0)
    key = jax.random.PRNGKey(0)
    kx, kp = jax.random.split(key)
    x = jax.random.normal(kx, (N, C, L), jnp.float32)
    params = make_params(kp, C)

    out = jax.block_until_ready(resnet_block(x, params))
    ref = jax.block_until_ready(resnet_block_reference(x, params))

    assert out.shape == (N, C, L // 3), out.shape
    assert jnp.allclose(out, ref, atol=1e-4, rtol=1e-4), \
        float(jnp.max(jnp.abs(out - ref)))
    print("KERNEL_OK")
</pallas_src>

<mosaic_0001>
module attributes {stable_mosaic.version = 11 : i64} {
  func.func @_resnet_block_kernel(%arg0: i32, %arg1: memref<3x32x128xf32, #tpu.memory_space<vmem>>, %arg2: memref<32x32xf32, #tpu.memory_space<vmem>>, %arg3: memref<32x1xf32, #tpu.memory_space<vmem>>, %arg4: memref<1xf32, #tpu.memory_space<smem>>, %arg5: memref<32x32xf32, #tpu.memory_space<vmem>>, %arg6: memref<32x1xf32, #tpu.memory_space<vmem>>, %arg7: memref<1xf32, #tpu.memory_space<smem>>, %arg8: memref<32x128xf32, #tpu.memory_space<vmem>>) attributes {dimension_semantics = [#tpu.dimension_semantics<parallel>], iteration_bounds = array<i64: 1>, scalar_prefetch = 0 : i64, scratch_operands = 0 : i64, tpu.core_type = #tpu.core_type<tc>, window_params = [{transform_indices = @transform_0, window_bounds = array<i64: 3, 32, 128>}, {pipeline_mode = #tpu.pipeline_mode<synchronous>, transform_indices = @transform_1, window_bounds = array<i64: 32, 32>}, {pipeline_mode = #tpu.pipeline_mode<synchronous>, transform_indices = @transform_2, window_bounds = array<i64: 32, 1>}, {transform_indices = @transform_3, window_bounds = array<i64: 1>}, {pipeline_mode = #tpu.pipeline_mode<synchronous>, transform_indices = @transform_4, window_bounds = array<i64: 32, 32>}, {pipeline_mode = #tpu.pipeline_mode<synchronous>, transform_indices = @transform_5, window_bounds = array<i64: 32, 1>}, {transform_indices = @transform_6, window_bounds = array<i64: 1>}, {transform_indices = @transform_7, window_bounds = array<i64: 32, 128>}]} {
    %c0 = arith.constant 0 : index
    %c0_0 = arith.constant 0 : index
    %0 = vector.load %arg2[%c0, %c0_0] : memref<32x32xf32, #tpu.memory_space<vmem>>, vector<32x32xf32>
    %c0_1 = arith.constant 0 : index
    %c0_2 = arith.constant 0 : index
    %1 = vector.load %arg5[%c0_1, %c0_2] : memref<32x32xf32, #tpu.memory_space<vmem>>, vector<32x32xf32>
    %c0_3 = arith.constant 0 : index
    %c0_4 = arith.constant 0 : index
    %2 = vector.load %arg3[%c0_3, %c0_4] : memref<32x1xf32, #tpu.memory_space<vmem>>, vector<32x1xf32>
    %c0_5 = arith.constant 0 : index
    %c0_6 = arith.constant 0 : index
    %3 = vector.load %arg6[%c0_5, %c0_6] : memref<32x1xf32, #tpu.memory_space<vmem>>, vector<32x1xf32>
    %c0_7 = arith.constant 0 : index
    %4 = memref.load %arg4[%c0_7] : memref<1xf32, #tpu.memory_space<smem>>
    %c0_8 = arith.constant 0 : index
    %5 = memref.load %arg7[%c0_8] : memref<1xf32, #tpu.memory_space<smem>>
    %c0_9 = arith.constant 0 : index
    %c0_10 = arith.constant 0 : index
    %c0_11 = arith.constant 0 : index
    %6 = vector.load %arg1[%c0_9, %c0_10, %c0_11] : memref<3x32x128xf32, #tpu.memory_space<vmem>>, vector<1x32x128xf32>
    %7 = vector.shape_cast %6 : vector<1x32x128xf32> to vector<32x128xf32>
    %cst = arith.constant dense<0.000000e+00> : vector<32x128xf32>
    %8 = tpu.matmul %0, %7, %cst {dimension_numbers = #tpu.dot_dimension_numbers<[1], [0], [0], [1], [0, 0, 1, 1], [], []>} : vector<32x32xf32>, vector<32x128xf32>, vector<32x128xf32> -> vector<32x128xf32>
    %9 = vector.broadcast %2 : vector<32x1xf32> to vector<32x128xf32>
    %10 = arith.addf %8, %9 : vector<32x128xf32>
    %cst_12 = arith.constant 0.000000e+00 : f32
    %11 = vector.broadcast %cst_12 : f32 to vector<32x128xf32>
    %12 = arith.cmpf ogt, %10, %11 : vector<32x128xf32>
    %13 = vector.broadcast %4 : f32 to vector<32x128xf32>
    %14 = arith.mulf %13, %10 : vector<32x128xf32>
    %15 = arith.select %12, %10, %14 : vector<32x128xi1>, vector<32x128xf32>
    %cst_13 = arith.constant dense<0.000000e+00> : vector<32x128xf32>
    %16 = tpu.matmul %1, %15, %cst_13 {dimension_numbers = #tpu.dot_dimension_numbers<[1], [0], [0], [1], [0, 0, 1, 1], [], []>} : vector<32x32xf32>, vector<32x128xf32>, vector<32x128xf32> -> vector<32x128xf32>
    %17 = vector.broadcast %3 : vector<32x1xf32> to vector<32x128xf32>
    %18 = arith.addf %16, %17 : vector<32x128xf32>
    %19 = arith.addf %18, %7 : vector<32x128xf32>
    %cst_14 = arith.constant 0.000000e+00 : f32
    %20 = vector.broadcast %cst_14 : f32 to vector<32x128xf32>
    %21 = arith.cmpf ogt, %19, %20 : vector<32x128xf32>
    %22 = vector.broadcast %5 : f32 to vector<32x128xf32>
    %23 = arith.mulf %22, %19 : vector<32x128xf32>
    %24 = arith.select %21, %19, %23 : vector<32x128xi1>, vector<32x128xf32>
    %c1 = arith.constant 1 : index
    %c0_15 = arith.constant 0 : index
    %c0_16 = arith.constant 0 : index
    %25 = vector.load %arg1[%c1, %c0_15, %c0_16] : memref<3x32x128xf32, #tpu.memory_space<vmem>>, vector<1x32x128xf32>
    %26 = vector.shape_cast %25 : vector<1x32x128xf32> to vector<32x128xf32>
    %cst_17 = arith.constant dense<0.000000e+00> : vector<32x128xf32>
    %27 = tpu.matmul %0, %26, %cst_17 {dimension_numbers = #tpu.dot_dimension_numbers<[1], [0], [0], [1], [0, 0, 1, 1], [], []>} : vector<32x32xf32>, vector<32x128xf32>, vector<32x128xf32> -> vector<32x128xf32>
    %28 = vector.broadcast %2 : vector<32x1xf32> to vector<32x128xf32>
    %29 = arith.addf %27, %28 : vector<32x128xf32>
    %cst_18 = arith.constant 0.000000e+00 : f32
    %30 = vector.broadcast %cst_18 : f32 to vector<32x128xf32>
    %31 = arith.cmpf ogt, %29, %30 : vector<32x128xf32>
    %32 = vector.broadcast %4 : f32 to vector<32x128xf32>
    %33 = arith.mulf %32, %29 : vector<32x128xf32>
    %34 = arith.select %31, %29, %33 : vector<32x128xi1>, vector<32x128xf32>
    %cst_19 = arith.constant dense<0.000000e+00> : vector<32x128xf32>
    %35 = tpu.matmul %1, %34, %cst_19 {dimension_numbers = #tpu.dot_dimension_numbers<[1], [0], [0], [1], [0, 0, 1, 1], [], []>} : vector<32x32xf32>, vector<32x128xf32>, vector<32x128xf32> -> vector<32x128xf32>
    %36 = vector.broadcast %3 : vector<32x1xf32> to vector<32x128xf32>
    %37 = arith.addf %35, %36 : vector<32x128xf32>
    %38 = arith.addf %37, %26 : vector<32x128xf32>
    %cst_20 = arith.constant 0.000000e+00 : f32
    %39 = vector.broadcast %cst_20 : f32 to vector<32x128xf32>
    %40 = arith.cmpf ogt, %38, %39 : vector<32x128xf32>
    %41 = vector.broadcast %5 : f32 to vector<32x128xf32>
    %42 = arith.mulf %41, %38 : vector<32x128xf32>
    %43 = arith.select %40, %38, %42 : vector<32x128xi1>, vector<32x128xf32>
    %44 = arith.maximumf %24, %43 : vector<32x128xf32>
    %c2 = arith.constant 2 : index
    %c0_21 = arith.constant 0 : index
    %c0_22 = arith.constant 0 : index
    %45 = vector.load %arg1[%c2, %c0_21, %c0_22] : memref<3x32x128xf32, #tpu.memory_space<vmem>>, vector<1x32x128xf32>
    %46 = vector.shape_cast %45 : vector<1x32x128xf32> to vector<32x128xf32>
    %cst_23 = arith.constant dense<0.000000e+00> : vector<32x128xf32>
    %47 = tpu.matmul %0, %46, %cst_23 {dimension_numbers = #tpu.dot_dimension_numbers<[1], [0], [0], [1], [0, 0, 1, 1], [], []>} : vector<32x32xf32>, vector<32x128xf32>, vector<32x128xf32> -> vector<32x128xf32>
    %48 = vector.broadcast %2 : vector<32x1xf32> to vector<32x128xf32>
    %49 = arith.addf %47, %48 : vector<32x128xf32>
    %cst_24 = arith.constant 0.000000e+00 : f32
    %50 = vector.broadcast %cst_24 : f32 to vector<32x128xf32>
    %51 = arith.cmpf ogt, %49, %50 : vector<32x128xf32>
    %52 = vector.broadcast %4 : f32 to vector<32x128xf32>
    %53 = arith.mulf %52, %49 : vector<32x128xf32>
    %54 = arith.select %51, %49, %53 : vector<32x128xi1>, vector<32x128xf32>
    %cst_25 = arith.constant dense<0.000000e+00> : vector<32x128xf32>
    %55 = tpu.matmul %1, %54, %cst_25 {dimension_numbers = #tpu.dot_dimension_numbers<[1], [0], [0], [1], [0, 0, 1, 1], [], []>} : vector<32x32xf32>, vector<32x128xf32>, vector<32x128xf32> -> vector<32x128xf32>
    %56 = vector.broadcast %3 : vector<32x1xf32> to vector<32x128xf32>
    %57 = arith.addf %55, %56 : vector<32x128xf32>
    %58 = arith.addf %57, %46 : vector<32x128xf32>
    %cst_26 = arith.constant 0.000000e+00 : f32
    %59 = vector.broadcast %cst_26 : f32 to vector<32x128xf32>
    %60 = arith.cmpf ogt, %58, %59 : vector<32x128xf32>
    %61 = vector.broadcast %5 : f32 to vector<32x128xf32>
    %62 = arith.mulf %61, %58 : vector<32x128xf32>
    %63 = arith.select %60, %58, %62 : vector<32x128xi1>, vector<32x128xf32>
    %64 = arith.maximumf %44, %63 : vector<32x128xf32>
    %c0_27 = arith.constant 0 : index
    %c0_28 = arith.constant 0 : index
    %65 = vector.load %arg8[%c0_27, %c0_28] : memref<32x128xf32, #tpu.memory_space<vmem>>, vector<32x128xf32>
    tpu.vector_store %arg8[%c0_27, %c0_28], %64 {strides = array<i32>} : memref<32x128xf32, #tpu.memory_space<vmem>>, vector<32x128xf32>,
    return
  }
  func.func @transform_0(%arg0: i32) -> (i32, i32, i32) {
    %c0_i32 = arith.constant 0 : i32
    %c0_i32_0 = arith.constant 0 : i32
    %c0_i32_1 = arith.constant 0 : i32
    return %c0_i32, %c0_i32_0, %arg0 : i32, i32, i32
  }
  func.func @transform_1(%arg0: i32) -> (i32, i32) {
    %c0_i32 = arith.constant 0 : i32
    %c0_i32_0 = arith.constant 0 : i32
    %c0_i32_1 = arith.constant 0 : i32
    return %c0_i32, %c0_i32_0 : i32, i32
  }
  func.func @transform_2(%arg0: i32) -> (i32, i32) {
    %c0_i32 = arith.constant 0 : i32
    %c0_i32_0 = arith.constant 0 : i32
    %c0_i32_1 = arith.constant 0 : i32
    return %c0_i32, %c0_i32_0 : i32, i32
  }
  func.func @transform_3(%arg0: i32) -> i32 {
    %c0_i32 = arith.constant 0 : i32
    %c0_i32_0 = arith.constant 0 : i32
    return %c0_i32 : i32
  }
  func.func @transform_4(%arg0: i32) -> (i32, i32) {
    %c0_i32 = arith.constant 0 : i32
    %c0_i32_0 = arith.constant 0 : i32
    %c0_i32_1 = arith.constant 0 : i32
    return %c0_i32, %c0_i32_0 : i32, i32
  }
  func.func @transform_5(%arg0: i32) -> (i32, i32) {
    %c0_i32 = arith.constant 0 : i32
    %c0_i32_0 = arith.constant 0 : i32
    %c0_i32_1 = arith.constant 0 : i32
    return %c0_i32, %c0_i32_0 : i32, i32
  }
  func.func @transform_6(%arg0: i32) -> i32 {
    %c0_i32 = arith.constant 0 : i32
    %c0_i32_0 = arith.constant 0 : i32
    return %c0_i32 : i32
  }
  func.func @transform_7(%arg0: i32) -> (i32, i32) {
    %c0_i32 = arith.constant 0 : i32
    %c0_i32_0 = arith.constant 0 : i32
    return %c0_i32, %arg0 : i32, i32
  }
}

</mosaic_0001>

<llo_original>
// kernel: tpu_custom_call.1
$region0: #{tpu_custom_call.1}
  #allocation0 [shape = 'u32[]', space=smem, size = 0x4, offset = 0x4, fixed_abs, tag = 'smem constant byte address 0x4 - core index']
  #allocation1 [shape = 'u32[72,128]{1,0:T(1,128)}', space=vmem, size = 0x9000, scoped, tag = 'internal scratch']
  #allocation2 [shape = 'f32[1]{0:T(128)S(6)}', space=smem, size = 0x200, scoped, tag = 'scoped memory for tpu_custom_call.1']
  #allocation3 [shape = 'f32[1]{0:T(128)S(6)}', space=smem, size = 0x200, scoped, tag = 'scoped memory for tpu_custom_call.1']
  %s0 = inlined_call_operand.hbm [shape: f32[3,32,128], index: 0, kind: input, shape index: {}]
  %s1 = inlined_call_operand.vmem [shape: f32[32,32], index: 1, kind: input, shape index: {}]
  %s2 = inlined_call_operand.vmem [shape: f32[32,1], index: 2, kind: input, shape index: {}]
  %s3 = inlined_call_operand.<no memory space> [shape: f32[1], index: 3, kind: input, shape index: {}]
  %s4 = inlined_call_operand.vmem [shape: f32[32,32], index: 4, kind: input, shape index: {}]
  %s5 = inlined_call_operand.vmem [shape: f32[32,1], index: 5, kind: input, shape index: {}]
  %s6 = inlined_call_operand.<no memory space> [shape: f32[1], index: 6, kind: input, shape index: {}]
  %s7 = inlined_call_operand.hbm [shape: f32[32,128], index: 7, kind: output, shape index: {}]
  %s8 = sld [smem:[#allocation0]]
  $region42: #{tpu_custom_call.1} parent=0
    _
  %s10 = ssub.s32 1, %s8
  %s11 = scalar_select 0, %s10, %s8
  %12 = sst [smem:[#allocation2]] %s3
  %13 = sst [smem:[#allocation3]] %s6
  $region1: #{tpu_custom_call.1} parent=0
    #allocation4 [shape = 'u8[49152]{0}', space=vmem, size = 0xc000, scoped, tag = 'input window, operand 0, single buffered']
    #allocation5 [shape = 's32[1]{0}', space=sflag, size = 0x4, scoped, tag = 'scoped memory for tpu_custom_call.1']
    #allocation6 [shape = 's32[1]{0}', space=sflag, size = 0x4, scoped, tag = 'scoped memory for tpu_custom_call.1']
    #allocation7 [shape = 'u8[16384]{0}', space=vmem, size = 0x4000, scoped, tag = 'output window, operand 0, single buffered']
    %14 = vsyncpa [#allocation5], 0
    %15 = vsyncpa [#allocation6], 0
    // Predicated region
    $region2: #{tpu_custom_call.1} parent=1 // pred_check
      _
    $region3: #{tpu_custom_call.1} parent=1 // pred_check_branch
      %17 = sbr.rel (0) target = $region5
    $region4: #{tpu_custom_call.1} parent=1 // pred_region
      %19 = vsyncadd [#allocation5], 0
      %s20 = sshll.u32 %s0, 4
      %s21 = int_to_ptr.hbm [resolvable:$true] %s20
      %s22 = sshll.u32 [#allocation4], 4
      %s23 = int_to_ptr.vmem [resolvable:$true] %s22
      %28 = dma.hbm_to_vmem [thread:$0]  %s21, 1536, %s23, [#allocation5], 128, 128, 8
    $region5: #{tpu_custom_call.1} parent=1 // pred_fallthru
      _
    // Predicated region
    $region6: #{tpu_custom_call.1} parent=1 // pred_check
      _
    $region7: #{tpu_custom_call.1} parent=1 // pred_check_branch
      %30 = sbr.rel (0) target = $region9
    $region8: #{tpu_custom_call.1} parent=1 // pred_region
      _
    $region9: #{tpu_custom_call.1} parent=1 // pred_fallthru
      _
    // Predicated region
    $region10: #{tpu_custom_call.1} parent=1 // pred_check
      _
    $region11: #{tpu_custom_call.1} parent=1 // pred_check_branch
      %32 = sbr.rel (0) target = $region13
    $region12: #{tpu_custom_call.1} parent=1 // pred_region
      _
    $region13: #{tpu_custom_call.1} parent=1 // pred_fallthru
      _
    // Predicated region
    $region14: #{tpu_custom_call.1} parent=1 // pred_check
      _
    $region15: #{tpu_custom_call.1} parent=1 // pred_check_branch
      %34 = sbr.rel (0) target = $region17
    $region16: #{tpu_custom_call.1} parent=1 // pred_region
      _
    $region17: #{tpu_custom_call.1} parent=1 // pred_fallthru
      _
    // Predicated region
    $region18: #{tpu_custom_call.1} parent=1 // pred_check
      _
    $region19: #{tpu_custom_call.1} parent=1 // pred_check_branch
      %36 = sbr.rel (0) target = $region21
    $region20: #{tpu_custom_call.1} parent=1 // pred_region
      _
    $region21: #{tpu_custom_call.1} parent=1 // pred_fallthru
      _
    // Predicated region
    $region22: #{tpu_custom_call.1} parent=1 // pred_check
      _
    $region23: #{tpu_custom_call.1} parent=1 // pred_check_branch
      %38 = sbr.rel (0) target = $region25
    $region24: #{tpu_custom_call.1} parent=1 // pred_region
      _
    $region25: #{tpu_custom_call.1} parent=1 // pred_fallthru
      _
    // Predicated region
    $region26: #{tpu_custom_call.1} parent=1 // pred_check
      _
    $region27: #{tpu_custom_call.1} parent=1 // pred_check_branch
      %40 = sbr.rel (0) target = $region29
    $region28: #{tpu_custom_call.1} parent=1 // pred_region
      _
    $region29: #{tpu_custom_call.1} parent=1 // pred_fallthru
      _
    // Predicated region
    $region30: #{tpu_custom_call.1} parent=1 // pred_check
      _
    $region31: #{tpu_custom_call.1} parent=1 // pred_check_branch
      %42 = sbr.rel (0) target = $region33
    $region32: #{tpu_custom_call.1} parent=1 // pred_region
      %44 = dma.done [#allocation5], 1536
    $region33: #{tpu_custom_call.1} parent=1 // pred_fallthru
      _
    %v45 = vld [vmem:[%s1] sm:$0xff]
    %v46 = vld [vmem:[%s1 + $0x8] sm:$0xff]
    %v47 = vld [vmem:[%s1 + $0x10] sm:$0xff]
    %v48 = vld [vmem:[%s1 + $0x18] sm:$0xff]
    %v49 = vld [vmem:[%s4] sm:$0xff]
    %v50 = vld [vmem:[%s4 + $0x8] sm:$0xff]
    %v51 = vld [vmem:[%s4 + $0x10] sm:$0xff]
    %v52 = vld [vmem:[%s4 + $0x18] sm:$0xff]
    %v53 = vld [vmem:[%s2] sm:$0xff]
    %v54 = vld [vmem:[%s2 + $0x8] sm:$0xff]
    %v55 = vld [vmem:[%s2 + $0x10] sm:$0xff]
    %v56 = vld [vmem:[%s2 + $0x18] sm:$0xff]
    %v57 = vld [vmem:[%s5] sm:$0xff]
    %v58 = vld [vmem:[%s5 + $0x8] sm:$0xff]
    %v59 = vld [vmem:[%s5 + $0x10] sm:$0xff]
    %v60 = vld [vmem:[%s5 + $0x18] sm:$0xff]
    %s61 = sld [smem:[#allocation2]]
    %s62 = sld [smem:[#allocation3]]
    %v63 = vld [vmem:[#allocation4] sm:$0xff]
    %v64 = vld [vmem:[#allocation4 + $0x8] sm:$0xff]
    %v65 = vld [vmem:[#allocation4 + $0x10] sm:$0xff]
    %v66 = vld [vmem:[#allocation4 + $0x18] sm:$0xff]
    %68 = vset.pattern.permute.xlu0 0
    %69 = vperm.xlu0 %68, %v53
    %v70 = vpop.permute.xlu0 %69
    %73 = vset.pattern.permute.xlu0 0
    %74 = vperm.xlu0 %73, %v54
    %v75 = vpop.permute.xlu0 %74
    %78 = vset.pattern.permute.xlu0 0
    %79 = vperm.xlu0 %78, %v55
    %v80 = vpop.permute.xlu0 %79
    %83 = vset.pattern.permute.xlu0 0
    %84 = vperm.xlu0 %83, %v56
    %v85 = vpop.permute.xlu0 %84
    %vm87 = vcmask 261120
    %v89 = vsel %vm87, %v45, 0
    %v92 = vsel %vm87, %v46, 0
    %v95 = vsel %vm87, %v47, 0
    %v98 = vsel %vm87, %v48, 0
    %100 = vmatpush.msra.mxu0 0.0
    %101 = vmatpush.msra.mxu0 0.0
    %102 = vmatpush.msra.mxu0 0.0
    %103 = vmatpush.msra.mxu0 0.0
    %104 = vmatpush.msra.mxu0 0.0
    %105 = vmatpush.msra.mxu0 0.0
    %106 = vmatpush.msra.mxu0 0.0
    %107 = vmatpush.msra.mxu0 0.0
    %108 = vmatpush.msra.mxu0 0.0
    %109 = vmatpush.msra.mxu0 0.0
    %110 = vmatpush.msra.mxu0 0.0
    %111 = vmatpush.msra.mxu0 0.0
    %112 = vmatpush.msra.mxu0 %v66
    %113 = vmatpush.msra.mxu0 %v65
    %114 = vmatpush.msra.mxu0 %v64
    %115 = vmatpush.msra.mxu0 %v63
    %116 = vmatmul.f32.gmra.mxu0 %v89
    %v117 = vpop.f32.mrf.mxu0
    %v118 = vadd.f32 %v70, %v117
    %119 = vmatmul.f32.gmra.mxu0 %v92
    %v120 = vpop.f32.mrf.mxu0
    %v121 = vadd.f32 %v75, %v120
    %122 = vmatmul.f32.gmra.mxu0 %v95
    %v123 = vpop.f32.mrf.mxu0
    %v124 = vadd.f32 %v80, %v123
    %125 = vmatmul.f32.gmra.mxu0 %v98
    %v126 = vpop.f32.mrf.mxu0
    %v127 = vadd.f32 %v85, %v126
    %128 = vdwg.mxu0
    %vm129 = vcmp.gt.f32.partialorder %v118, 0.0
    %vm130 = vcmp.gt.f32.partialorder %v121, 0.0
    %vm131 = vcmp.gt.f32.partialorder %v124, 0.0
    %vm132 = vcmp.gt.f32.partialorder %v127, 0.0
    %v133 = vstv %s61
    %v134 = vmul.f32 %v133, %v118
    %v135 = vmul.f32 %v133, %v121
    %v136 = vmul.f32 %v133, %v124
    %v137 = vmul.f32 %v133, %v127
    %v138 = vsel %vm129, %v118, %v134
    %v139 = vsel %vm130, %v121, %v135
    %v140 = vsel %vm131, %v124, %v136
    %v141 = vsel %vm132, %v127, %v137
    %143 = vset.pattern.permute.xlu0 0
    %144 = vperm.xlu0 %143, %v57
    %v145 = vpop.permute.xlu0 %144
    %148 = vset.pattern.permute.xlu0 0
    %149 = vperm.xlu0 %148, %v58
    %v150 = vpop.permute.xlu0 %149
    %153 = vset.pattern.permute.xlu0 0
    %154 = vperm.xlu0 %153, %v59
    %v155 = vpop.permute.xlu0 %154
    %158 = vset.pattern.permute.xlu0 0
    %159 = vperm.xlu0 %158, %v60
    %v160 = vpop.permute.xlu0 %159
    %v163 = vsel %vm87, %v49, 0
    %v166 = vsel %vm87, %v50, 0
    %v169 = vsel %vm87, %v51, 0
    %v172 = vsel %vm87, %v52, 0
    %174 = vmatpush.msra.mxu0 0.0
    %175 = vmatpush.msra.mxu0 0.0
    %176 = vmatpush.msra.mxu0 0.0
    %177 = vmatpush.msra.mxu0 0.0
    %178 = vmatpush.msra.mxu0 0.0
    %179 = vmatpush.msra.mxu0 0.0
    %180 = vmatpush.msra.mxu0 0.0
    %181 = vmatpush.msra.mxu0 0.0
    %182 = vmatpush.msra.mxu0 0.0
    %183 = vmatpush.msra.mxu0 0.0
    %184 = vmatpush.msra.mxu0 0.0
    %185 = vmatpush.msra.mxu0 0.0
    %186 = vmatpush.msra.mxu0 %v141
    %187 = vmatpush.msra.mxu0 %v140
    %188 = vmatpush.msra.mxu0 %v139
    %189 = vmatpush.msra.mxu0 %v138
    %190 = vmatmul.f32.gmra.mxu0 %v163
    %v191 = vpop.f32.mrf.mxu0
    %v192 = vadd.f32 %v145, %v191
    %193 = vmatmul.f32.gmra.mxu0 %v166
    %v194 = vpop.f32.mrf.mxu0
    %v195 = vadd.f32 %v150, %v194
    %196 = vmatmul.f32.gmra.mxu0 %v169
    %v197 = vpop.f32.mrf.mxu0
    %v198 = vadd.f32 %v155, %v197
    %199 = vmatmul.f32.gmra.mxu0 %v172
    %v200 = vpop.f32.mrf.mxu0
    %v201 = vadd.f32 %v160, %v200
    %202 = vdwg.mxu0
    %v203 = vadd.f32 %v192, %v63
    %v204 = vadd.f32 %v195, %v64
    %v205 = vadd.f32 %v198, %v65
    %v206 = vadd.f32 %v201, %v66
    %vm207 = vcmp.gt.f32.partialorder %v203, 0.0
    %vm208 = vcmp.gt.f32.partialorder %v204, 0.0
    %vm209 = vcmp.gt.f32.partialorder %v205, 0.0
    %vm210 = vcmp.gt.f32.partialorder %v206, 0.0
    %v211 = vstv %s62
    %v212 = vmul.f32 %v211, %v203
    %v213 = vmul.f32 %v211, %v204
    %v214 = vmul.f32 %v211, %v205
    %v215 = vmul.f32 %v211, %v206
    %v216 = vsel %vm207, %v203, %v212
    %v217 = vsel %vm208, %v204, %v213
    %v218 = vsel %vm209, %v205, %v214
    %v219 = vsel %vm210, %v206, %v215
    %s220 = scalar_lea.vmem [#allocation4], 32
    %v221 = vld [vmem:[%s220] sm:$0xff]
    %v222 = vld [vmem:[%s220 + $0x8] sm:$0xff]
    %v223 = vld [vmem:[%s220 + $0x10] sm:$0xff]
    %v224 = vld [vmem:[%s220 + $0x18] sm:$0xff]
    %225 = vmatpush.msra.mxu0 0.0
    %226 = vmatpush.msra.mxu0 0.0
    %227 = vmatpush.msra.mxu0 0.0
    %228 = vmatpush.msra.mxu0 0.0
    %229 = vmatpush.msra.mxu0 0.0
    %230 = vmatpush.msra.mxu0 0.0
    %231 = vmatpush.msra.mxu0 0.0
    %232 = vmatpush.msra.mxu0 0.0
    %233 = vmatpush.msra.mxu0 0.0
    %234 = vmatpush.msra.mxu0 0.0
    %235 = vmatpush.msra.mxu0 0.0
    %236 = vmatpush.msra.mxu0 0.0
    %237 = vmatpush.msra.mxu0 %v224
    %238 = vmatpush.msra.mxu0 %v223
    %239 = vmatpush.msra.mxu0 %v222
    %240 = vmatpush.msra.mxu0 %v221
    %241 = vmatmul.f32.gmra.mxu0 %v89
    %v242 = vpop.f32.mrf.mxu0
    %v243 = vadd.f32 %v70, %v242
    %244 = vmatmul.f32.gmra.mxu0 %v92
    %v245 = vpop.f32.mrf.mxu0
    %v246 = vadd.f32 %v75, %v245
    %247 = vmatmul.f32.gmra.mxu0 %v95
    %v248 = vpop.f32.mrf.mxu0
    %v249 = vadd.f32 %v80, %v248
    %250 = vmatmul.f32.gmra.mxu0 %v98
    %v251 = vpop.f32.mrf.mxu0
    %v252 = vadd.f32 %v85, %v251
    %253 = vdwg.mxu0
    %vm254 = vcmp.gt.f32.partialorder %v243, 0.0
    %vm255 = vcmp.gt.f32.partialorder %v246, 0.0
    %vm256 = vcmp.gt.f32.partialorder %v249, 0.0
    %vm257 = vcmp.gt.f32.partialorder %v252, 0.0
    %v258 = vmul.f32 %v133, %v243
    %v259 = vmul.f32 %v133, %v246
    %v260 = vmul.f32 %v133, %v249
    %v261 = vmul.f32 %v133, %v252
    %v262 = vsel %vm254, %v243, %v258
    %v263 = vsel %vm255, %v246, %v259
    %v264 = vsel %vm256, %v249, %v260
    %v265 = vsel %vm257, %v252, %v261
    %266 = vmatpush.msra.mxu0 0.0
    %267 = vmatpush.msra.mxu0 0.0
    %268 = vmatpush.msra.mxu0 0.0
    %269 = vmatpush.msra.mxu0 0.0
    %270 = vmatpush.msra.mxu0 0.0
    %271 = vmatpush.msra.mxu0 0.0
    %272 = vmatpush.msra.mxu0 0.0
    %273 = vmatpush.msra.mxu0 0.0
    %274 = vmatpush.msra.mxu0 0.0
    %275 = vmatpush.msra.mxu0 0.0
    %276 = vmatpush.msra.mxu0 0.0
    %277 = vmatpush.msra.mxu0 0.0
    %278 = vmatpush.msra.mxu0 %v265
    %279 = vmatpush.msra.mxu0 %v264
    %280 = vmatpush.msra.mxu0 %v263
    %281 = vmatpush.msra.mxu0 %v262
    %282 = vmatmul.f32.gmra.mxu0 %v163
    %v283 = vpop.f32.mrf.mxu0
    %v284 = vadd.f32 %v145, %v283
    %285 = vmatmul.f32.gmra.mxu0 %v166
    %v286 = vpop.f32.mrf.mxu0
    %v287 = vadd.f32 %v150, %v286
    %288 = vmatmul.f32.gmra.mxu0 %v169
    %v289 = vpop.f32.mrf.mxu0
    %v290 = vadd.f32 %v155, %v289
    %291 = vmatmul.f32.gmra.mxu0 %v172
    %v292 = vpop.f32.mrf.mxu0
    %v293 = vadd.f32 %v160, %v292
    %294 = vdwg.mxu0
    %v295 = vadd.f32 %v284, %v221
    %v296 = vadd.f32 %v287, %v222
    %v297 = vadd.f32 %v290, %v223
    %v298 = vadd.f32 %v293, %v224
    %vm299 = vcmp.gt.f32.partialorder %v295, 0.0
    %vm300 = vcmp.gt.f32.partialorder %v296, 0.0
    %vm301 = vcmp.gt.f32.partialorder %v297, 0.0
    %vm302 = vcmp.gt.f32.partialorder %v298, 0.0
    %v303 = vmul.f32 %v211, %v295
    %v304 = vmul.f32 %v211, %v296
    %v305 = vmul.f32 %v211, %v297
    %v306 = vmul.f32 %v211, %v298
    %v307 = vsel %vm299, %v295, %v303
    %v308 = vsel %vm300, %v296, %v304
    %v309 = vsel %vm301, %v297, %v305
    %v310 = vsel %vm302, %v298, %v306
    %v311 = vmax.f32 %v216, %v307
    %v312 = vmax.f32 %v217, %v308
    %v313 = vmax.f32 %v218, %v309
    %v314 = vmax.f32 %v219, %v310
    %s315 = scalar_lea.vmem [#allocation4], 64
    %v316 = vld [vmem:[%s315] sm:$0xff]
    %v317 = vld [vmem:[%s315 + $0x8] sm:$0xff]
    %v318 = vld [vmem:[%s315 + $0x10] sm:$0xff]
    %v319 = vld [vmem:[%s315 + $0x18] sm:$0xff]
    %320 = vmatpush.msra.mxu0 0.0
    %321 = vmatpush.msra.mxu0 0.0
    %322 = vmatpush.msra.mxu0 0.0
    %323 = vmatpush.msra.mxu0 0.0
    %324 = vmatpush.msra.mxu0 0.0
    %325 = vmatpush.msra.mxu0 0.0
    %326 = vmatpush.msra.mxu0 0.0
    %327 = vmatpush.msra.mxu0 0.0
    %328 = vmatpush.msra.mxu0 0.0
    %329 = vmatpush.msra.mxu0 0.0
    %330 = vmatpush.msra.mxu0 0.0
    %331 = vmatpush.msra.mxu0 0.0
    %332 = vmatpush.msra.mxu0 %v319
    %333 = vmatpush.msra.mxu0 %v318
    %334 = vmatpush.msra.mxu0 %v317
    %335 = vmatpush.msra.mxu0 %v316
    %336 = vmatmul.f32.gmra.mxu0 %v89
    %v337 = vpop.f32.mrf.mxu0
    %v338 = vadd.f32 %v70, %v337
    %339 = vmatmul.f32.gmra.mxu0 %v92
    %v340 = vpop.f32.mrf.mxu0
    %v341 = vadd.f32 %v75, %v340
    %342 = vmatmul.f32.gmra.mxu0 %v95
    %v343 = vpop.f32.mrf.mxu0
    %v344 = vadd.f32 %v80, %v343
    %345 = vmatmul.f32.gmra.mxu0 %v98
    %v346 = vpop.f32.mrf.mxu0
    %v347 = vadd.f32 %v85, %v346
    %348 = vdwg.mxu0
    %vm349 = vcmp.gt.f32.partialorder %v338, 0.0
    %vm350 = vcmp.gt.f32.partialorder %v341, 0.0
    %vm351 = vcmp.gt.f32.partialorder %v344, 0.0
    %vm352 = vcmp.gt.f32.partialorder %v347, 0.0
    %v353 = vmul.f32 %v133, %v338
    %v354 = vmul.f32 %v133, %v341
    %v355 = vmul.f32 %v133, %v344
    %v356 = vmul.f32 %v133, %v347
    %v357 = vsel %vm349, %v338, %v353
    %v358 = vsel %vm350, %v341, %v354
    %v359 = vsel %vm351, %v344, %v355
    %v360 = vsel %vm352, %v347, %v356
    %361 = vmatpush.msra.mxu0 0.0
    %362 = vmatpush.msra.mxu0 0.0
    %363 = vmatpush.msra.mxu0 0.0
    %364 = vmatpush.msra.mxu0 0.0
    %365 = vmatpush.msra.mxu0 0.0
    %366 = vmatpush.msra.mxu0 0.0
    %367 = vmatpush.msra.mxu0 0.0
    %368 = vmatpush.msra.mxu0 0.0
    %369 = vmatpush.msra.mxu0 0.0
    %370 = vmatpush.msra.mxu0 0.0
    %371 = vmatpush.msra.mxu0 0.0
    %372 = vmatpush.msra.mxu0 0.0
    %373 = vmatpush.msra.mxu0 %v360
    %374 = vmatpush.msra.mxu0 %v359
    %375 = vmatpush.msra.mxu0 %v358
    %376 = vmatpush.msra.mxu0 %v357
    %377 = vmatmul.f32.gmra.mxu0 %v163
    %v378 = vpop.f32.mrf.mxu0
    %v379 = vadd.f32 %v145, %v378
    %380 = vmatmul.f32.gmra.mxu0 %v166
    %v381 = vpop.f32.mrf.mxu0
    %v382 = vadd.f32 %v150, %v381
    %383 = vmatmul.f32.gmra.mxu0 %v169
    %v384 = vpop.f32.mrf.mxu0
    %v385 = vadd.f32 %v155, %v384
    %386 = vmatmul.f32.gmra.mxu0 %v172
    %v387 = vpop.f32.mrf.mxu0
    %v388 = vadd.f32 %v160, %v387
    %389 = vdwg.mxu0
    %v390 = vadd.f32 %v379, %v316
    %v391 = vadd.f32 %v382, %v317
    %v392 = vadd.f32 %v385, %v318
    %v393 = vadd.f32 %v388, %v319
    %vm394 = vcmp.gt.f32.partialorder %v390, 0.0
    %vm395 = vcmp.gt.f32.partialorder %v391, 0.0
    %vm396 = vcmp.gt.f32.partialorder %v392, 0.0
    %vm397 = vcmp.gt.f32.partialorder %v393, 0.0
    %v398 = vmul.f32 %v211, %v390
    %v399 = vmul.f32 %v211, %v391
    %v400 = vmul.f32 %v211, %v392
    %v401 = vmul.f32 %v211, %v393
    %v402 = vsel %vm394, %v390, %v398
    %v403 = vsel %vm395, %v391, %v399
    %v404 = vsel %vm396, %v392, %v400
    %v405 = vsel %vm397, %v393, %v401
    %v406 = vmax.f32 %v311, %v402
    %v407 = vmax.f32 %v312, %v403
    %v408 = vmax.f32 %v313, %v404
    %v409 = vmax.f32 %v314, %v405
    %410 = vst [vmem:[#allocation7] sm:$0xff] %v406
    %411 = vst [vmem:[#allocation7 + $0x8] sm:$0xff] %v407
    %412 = vst [vmem:[#allocation7 + $0x10] sm:$0xff] %v408
    %413 = vst [vmem:[#allocation7 + $0x18] sm:$0xff] %v409
    // Predicated region
    $region34: #{tpu_custom_call.1} parent=1 // pred_check
      _
    $region35: #{tpu_custom_call.1} parent=1 // pred_check_branch
      %415 = sbr.rel (0) target = $region37
    $region36: #{tpu_custom_call.1} parent=1 // pred_region
      %417 = vsyncadd [#allocation6], 0
      %s418 = sshll.u32 [#allocation7], 4
      %s419 = int_to_ptr.vmem [resolvable:$true] %s418
      %s420 = sshll.u32 %s7, 4
      %s421 = int_to_ptr.hbm [resolvable:$true] %s420
      %426 = dma.vmem_to_hbm [thread:$0]  %s419, 512, %s421, [#allocation6], 128, 128, 8
    $region37: #{tpu_custom_call.1} parent=1 // pred_fallthru
      _
    // Predicated region
    $region38: #{tpu_custom_call.1} parent=1 // pred_check
      _
    $region39: #{tpu_custom_call.1} parent=1 // pred_check_branch
      %428 = sbr.rel (0) target = $region41
    $region40: #{tpu_custom_call.1} parent=1 // pred_region
      %430 = dma.done [#allocation6], 512
    $region41: #{tpu_custom_call.1} parent=1 // pred_fallthru
      _
    %431 = vsyncpa [#allocation5], 1
    %432 = vsyncpa [#allocation6], 1

</llo_original>
